<compile_context>
chip_gen: v6e
topology: v6e:2x2x1
jax: 0.10.0
libtpu: 0.0.40
codegen_flags: <defaults>
</compile_context>

<pallas_src>
import functools

import jax
import jax.numpy as jnp
from jax.experimental import pallas as pl
from jax.experimental.pallas import tpu as pltpu


def _fatrelu_kernel(x_ref, o_ref, *, threshold):
    x = x_ref[...]
    o_ref[...] = jnp.where(x >= threshold, x, jnp.zeros_like(x))


_TARGET_BLOCK_BYTES = 2 << 20  # ~2 MiB per block buffer


def _fatrelu_2d(x2d: jax.Array, threshold: float) -> jax.Array:
    rows, cols = x2d.shape
    itemsize = jnp.dtype(x2d.dtype).itemsize

    # Block rows targeting ~2 MiB per block, multiple of 8 sublanes.
    br = max(8, _TARGET_BLOCK_BYTES // (cols * itemsize))
    br = (br // 8) * 8
    if br >= rows:
        br = rows  # single whole-array block (block dim == full array dim is allowed)
    grid = (pl.cdiv(rows, br),)

    kernel = functools.partial(_fatrelu_kernel, threshold=threshold)
    return pl.pallas_call(
        kernel,
        out_shape=jax.ShapeDtypeStruct((rows, cols), x2d.dtype),
        grid_spec=pltpu.PrefetchScalarGridSpec(
            num_scalar_prefetch=0,
            grid=grid,
            in_specs=[pl.BlockSpec((br, cols), lambda i: (i, 0))],
            out_specs=pl.BlockSpec((br, cols), lambda i: (i, 0)),
        ),
        compiler_params=pltpu.CompilerParams(
            dimension_semantics=("parallel",),
        ),
    )(x2d)


def fatrelu(x: jax.Array, threshold: float = 0.0) -> jax.Array:
    orig_shape = x.shape
    n = x.size

    # Fast path: widest lane-dense column count that divides n (no extra HBM passes).
    cols = None
    for c in (1024, 512, 256, 128):
        if n % c == 0:
            cols = c
            break

    if cols is not None:
        x2d = x.reshape(n // cols, cols)  # contiguous reshape: no copy
        out = _fatrelu_2d(x2d, threshold)
        return out.reshape(orig_shape)

    # Slow path (n not a multiple of 128): pad the flat tail once, slice it back off.
    lane = 128
    padded = pl.cdiv(n, lane) * lane
    x_flat = jnp.pad(x.reshape(-1), (0, padded - n))
    out = _fatrelu_2d(x_flat.reshape(padded // lane, lane), threshold)
    return out.reshape(-1)[:n].reshape(orig_shape)


if __name__ == "__main__":
    key = jax.random.PRNGKey(0)
    x = jax.random.normal(key, (2, 4, 16, 16), dtype=jnp.float32)  # NCHW like the module
    threshold = 0.3

    y = fatrelu(x, threshold)
    jax.block_until_ready(y)

    # Reference: torch.zeros_like + masked assignment == where(x >= thr, x, 0)
    y_ref = jnp.where(x >= threshold, x, jnp.zeros_like(x))
    assert y.shape == x.shape and y.dtype == x.dtype
    assert jnp.array_equal(y, y_ref)

    print("KERNEL_OK")
</pallas_src>

<mosaic_0001>
module attributes {stable_mosaic.version = 11 : i64} {
  func.func @_fatrelu_kernel(%arg0: i32, %arg1: memref<2x1024xf32, #tpu.memory_space<vmem>>, %arg2: memref<2x1024xf32, #tpu.memory_space<vmem>>) attributes {dimension_semantics = [#tpu.dimension_semantics<parallel>], iteration_bounds = array<i64: 1>, scalar_prefetch = 0 : i64, scratch_operands = 0 : i64, tpu.core_type = #tpu.core_type<tc>, window_params = [{transform_indices = @transform_0, window_bounds = array<i64: 2, 1024>}, {transform_indices = @transform_1, window_bounds = array<i64: 2, 1024>}]} {
    %c0 = arith.constant 0 : index
    %c0_0 = arith.constant 0 : index
    %0 = vector.load %arg1[%c0, %c0_0] : memref<2x1024xf32, #tpu.memory_space<vmem>>, vector<2x1024xf32>
    %cst = arith.constant 3.000000e-01 : f32
    %1 = vector.broadcast %cst : f32 to vector<2x1024xf32>
    %2 = arith.cmpf oge, %0, %1 : vector<2x1024xf32>
    %cst_1 = arith.constant 0.000000e+00 : f32
    %3 = vector.broadcast %cst_1 : f32 to vector<2x1024xf32>
    %4 = arith.select %2, %0, %3 : vector<2x1024xi1>, vector<2x1024xf32>
    %c0_2 = arith.constant 0 : index
    %c0_3 = arith.constant 0 : index
    %5 = vector.load %arg2[%c0_2, %c0_3] : memref<2x1024xf32, #tpu.memory_space<vmem>>, vector<2x1024xf32>
    tpu.vector_store %arg2[%c0_2, %c0_3], %4 {strides = array<i32>} : memref<2x1024xf32, #tpu.memory_space<vmem>>, vector<2x1024xf32>,
    return
  }
  func.func @transform_0(%arg0: i32) -> (i32, i32) {
    %c0_i32 = arith.constant 0 : i32
    %c0_i32_0 = arith.constant 0 : i32
    return %arg0, %c0_i32 : i32, i32
  }
  func.func @transform_1(%arg0: i32) -> (i32, i32) {
    %c0_i32 = arith.constant 0 : i32
    %c0_i32_0 = arith.constant 0 : i32
    return %arg0, %c0_i32 : i32, i32
  }
}

</mosaic_0001>

<llo_original>
// kernel: tpu_custom_call.1
$region0: #{tpu_custom_call.1}
  #allocation0 [shape = 'u32[]', space=smem, size = 0x4, offset = 0x4, fixed_abs, tag = 'smem constant byte address 0x4 - core index']
  #allocation1 [shape = 'u32[144,128]{1,0:T(1,128)}', space=vmem, size = 0x12000, scoped, tag = 'internal scratch']
  %s0 = inlined_call_operand.hbm [shape: f32[2,1024], index: 0, kind: input, shape index: {}]
  %s1 = inlined_call_operand.hbm [shape: f32[2,1024], index: 1, kind: output, shape index: {}]
  %s2 = sld [smem:[#allocation0]]
  $region18: #{tpu_custom_call.1} parent=0
    _
  %s4 = ssub.s32 1, %s2
  %s5 = scalar_select 0, %s4, %s2
  $region1: #{tpu_custom_call.1} parent=0
    #allocation2 [shape = 'u8[8192]{0}', space=vmem, size = 0x2000, scoped, tag = 'input window, operand 0, single buffered']
    #allocation3 [shape = 's32[1]{0}', space=sflag, size = 0x4, scoped, tag = 'scoped memory for tpu_custom_call.1']
    #allocation4 [shape = 's32[1]{0}', space=sflag, size = 0x4, scoped, tag = 'scoped memory for tpu_custom_call.1']
    #allocation5 [shape = 'u8[8192]{0}', space=vmem, size = 0x2000, scoped, tag = 'output window, operand 0, single buffered']
    %6 = vsyncpa [#allocation3], 0
    %7 = vsyncpa [#allocation4], 0
    // Predicated region
    $region2: #{tpu_custom_call.1} parent=1 // pred_check
      _
    $region3: #{tpu_custom_call.1} parent=1 // pred_check_branch
      %9 = sbr.rel (0) target = $region5
    $region4: #{tpu_custom_call.1} parent=1 // pred_region
      %s11 = ssub.s32 256, 256
      %12 = vsyncadd [#allocation3], %s11
      %s14 = sshll.u32 [#allocation2], 4
      %s15 = int_to_ptr.vmem [resolvable:$true] %s14
      %17 = dma.hbm_to_vmem [thread:$0]  %s0, 256, %s15, [#allocation3]
    $region5: #{tpu_custom_call.1} parent=1 // pred_fallthru
      _
    // Predicated region
    $region6: #{tpu_custom_call.1} parent=1 // pred_check
      _
    $region7: #{tpu_custom_call.1} parent=1 // pred_check_branch
      %19 = sbr.rel (0) target = $region9
    $region8: #{tpu_custom_call.1} parent=1 // pred_region
      %20 = dma.done [#allocation3], 256
    $region9: #{tpu_custom_call.1} parent=1 // pred_fallthru
      _
    %v21 = vld [vmem:[#allocation2] sm:$0xff]
    %v22 = vld [vmem:[#allocation2 + $0x8] sm:$0xff]
    %vm23 = vcmp.ge.f32.partialorder %v21, 0.3
    %vm24 = vcmp.ge.f32.partialorder %v22, 0.3
    %v25 = vsel %vm23, %v21, 0.0
    %v26 = vsel %vm24, %v22, 0.0
    %27 = vst [vmem:[#allocation5] sm:$0xff] %v25
    %28 = vst [vmem:[#allocation5 + $0x8] sm:$0xff] %v26
    // Predicated region
    $region10: #{tpu_custom_call.1} parent=1 // pred_check
      _
    $region11: #{tpu_custom_call.1} parent=1 // pred_check_branch
      %30 = sbr.rel (0) target = $region13
    $region12: #{tpu_custom_call.1} parent=1 // pred_region
      %s32 = ssub.s32 256, 256
      %33 = vsyncadd [#allocation4], %s32
      %s35 = sshll.u32 [#allocation5], 4
      %s36 = int_to_ptr.vmem [resolvable:$true] %s35
      %38 = dma.vmem_to_hbm [thread:$0]  %s36, 256, %s1, [#allocation4]
    $region13: #{tpu_custom_call.1} parent=1 // pred_fallthru
      _
    // Predicated region
    $region14: #{tpu_custom_call.1} parent=1 // pred_check
      _
    $region15: #{tpu_custom_call.1} parent=1 // pred_check_branch
      %40 = sbr.rel (0) target = $region17
    $region16: #{tpu_custom_call.1} parent=1 // pred_region
      %41 = dma.done [#allocation4], 256
    $region17: #{tpu_custom_call.1} parent=1 // pred_fallthru
      _
    %42 = vsyncpa [#allocation3], 1
    %43 = vsyncpa [#allocation4], 1

</llo_original>
